<compile_context>
chip_gen: v6e
topology: v6e:2x2x1
jax: 0.10.0
libtpu: 0.0.40
codegen_flags: <defaults>
</compile_context>

<pallas_src>
import functools

import jax
import jax.numpy as jnp
import numpy as np
from jax.experimental import pallas as pl
from jax.experimental.pallas import tpu as pltpu

_LANES = 128
_ACC_SUB = 8            # sublane rows of the per-split f32 partial-sum output block
_MAX_TILE_ROWS = 16384  # keeps the narrow (tile_n, 1) int32 target DMA reasonable


def _round_up(x: int, m: int) -> int:
    return ((x + m - 1) // m) * m


def _sublane(dtype) -> int:
    # minimum second-to-last block dim: 16 for 16-bit dtypes, 8 for 32-bit
    return 16 if jnp.dtype(dtype).itemsize == 2 else 8


def _vmem_plan():
    """Returns (working_set_budget_bytes, vmem_limit_bytes) from the chip's VMEM size."""
    cap = 64 * 1024 * 1024  # conservative default: v7x per-core VMEM
    try:
        cap = int(getattr(pltpu.get_tpu_info(), "vmem_capacity_bytes", cap))
    except Exception:
        pass
    budget = cap // 2  # double-buffered inputs + f32 temporaries
    limit = max(32 << 20, min(cap - (8 << 20), budget + (16 << 20)))
    return budget, int(limit)


# ----------------------------- kernels -------------------------------------


def _cross_entropy_kernel(pred_ref, tgt_ref, out_ref, acc_ref, *,
                          rows_per_split, n_valid):
    """One (tile_n, C) tile of rows; per-split scalar accumulation in SMEM scratch."""
    p = pl.program_id(0)
    i = pl.program_id(1)

    @pl.when(i == 0)
    def _init():
        acc_ref[0] = jnp.float32(0.0)

    logits = pred_ref[...].astype(jnp.float32)           # (tile_n, C) upcast in-vreg
    tgt = tgt_ref[...]                                    # (tile_n, 1) int32
    tn, c = logits.shape

    # numerically stable log-softmax pieces, kept 2-D (clean sublane layout)
    m = jnp.max(logits, axis=-1, keepdims=True)           # (tile_n, 1)
    shifted = logits - m
    cls_ids = jax.lax.broadcasted_iota(jnp.int32, (tn, c), 1)
    picked = jnp.sum(jnp.where(cls_ids == tgt, shifted, 0.0),
                     axis=-1, keepdims=True)               # shifted target logit
    lse = jnp.log(jnp.sum(jnp.exp(shifted), axis=-1, keepdims=True))
    per_row = lse - picked                                  # = logsumexp - target_logit

    if n_valid is not None:
        # mask rows past the real batch (padded edge tile / overshooting split);
        # jnp.where *selects*, so garbage rows never reach the accumulator.
        start = p * rows_per_split + i * tn
        rows = start + jax.lax.broadcasted_iota(jnp.int32, (tn, 1), 0)
        per_row = jnp.where(rows < n_valid, per_row, 0.0)

    acc_ref[0] += jnp.sum(per_row)

    @pl.when(i == pl.num_programs(1) - 1)
    def _finalize():
        out_ref[...] = jnp.full(out_ref.shape, acc_ref[0], dtype=jnp.float32)


def _bce_kernel(pred_ref, tgt_ref, out_ref, acc_ref, *,
                rows_per_split, n_valid, wloss):
    """One (tile_r, 128) lane-dense tile of binary logits/targets."""
    p = pl.program_id(0)
    i = pl.program_id(1)

    @pl.when(i == 0)
    def _init():
        acc_ref[0] = jnp.float32(0.0)

    x = pred_ref[...].astype(jnp.float32)     # (tile_r, 128) logits, upcast in-vreg
    t = tgt_ref[...].astype(jnp.float32)      # (tile_r, 128) targets in {0, 1}
    tr, lanes = x.shape

    # BCE(sigmoid(x), t) via log-sigmoid: log(sig) = -softplus(-x), log(1-sig) = -softplus(x).
    # PyTorch's binary_cross_entropy clamps the log terms at -100.
    sp_pos = jnp.maximum(x, 0.0) + jnp.log(1.0 + jnp.exp(-jnp.abs(x)))   # softplus(x)
    sp_neg = sp_pos - x                                                   # softplus(-x)
    loss = t * jnp.minimum(sp_neg, 100.0) + (1.0 - t) * jnp.minimum(sp_pos, 100.0)

    if wloss:
        # FMA form of where(t == 1, 0.7, 0.3); exact for {0,1} targets.
        loss = (0.3 + 0.4 * t) * loss

    if n_valid is not None:
        start = (p * rows_per_split + i * tr) * lanes
        flat = (start
                + jax.lax.broadcasted_iota(jnp.int32, (tr, lanes), 0) * lanes
                + jax.lax.broadcasted_iota(jnp.int32, (tr, lanes), 1))
        loss = jnp.where(flat < n_valid, loss, 0.0)

    acc_ref[0] += jnp.sum(loss)

    @pl.when(i == pl.num_programs(1) - 1)
    def _finalize():
        out_ref[...] = jnp.full(out_ref.shape, acc_ref[0], dtype=jnp.float32)


# ----------------------------- wrappers ------------------------------------


def _launch(kernel, arrays, block_shapes, in_map, num_splits, t_split, vmem_limit, cost):
    """Shared pallas_call builder for both loss paths."""
    partials = pl.pallas_call(
        kernel,
        out_shape=jax.ShapeDtypeStruct((num_splits, _ACC_SUB, _LANES), jnp.float32),
        grid=(num_splits, t_split),
        in_specs=[pl.BlockSpec(bs, in_map) for bs in block_shapes],
        out_specs=pl.BlockSpec((1, _ACC_SUB, _LANES), lambda p, i: (p, 0, 0)),
        scratch_shapes=[pltpu.SMEM((1,), jnp.float32)],
        compiler_params=pltpu.CompilerParams(
            dimension_semantics=("parallel", "arbitrary"),
            vmem_limit_bytes=vmem_limit),
        cost_estimate=cost,
    )(*arrays)
    return jnp.sum(partials[:, 0, 0])   # sum the per-TensorCore partials


def cross_entropy_loss(pred, target, reduction="mean", tile_rows=None, num_splits=None):
    """mean/sum cross-entropy over (N, C) logits + (N,) integer targets."""
    assert reduction in ("mean", "sum")
    n, c = pred.shape
    itemsize = jnp.dtype(pred.dtype).itemsize
    sub = _sublane(pred.dtype)
    c_pad = _round_up(c, _LANES)          # VMEM lane padding of the logits tile

    budget, vmem_limit = _vmem_plan()
    # per-row VMEM bytes: 2x double-buffered pred tile (lane-padded) +
    # 2x double-buffered (tile_n, 1) int32 target tile (pads to 128 lanes) +
    # ~5 f32 (tile_n, c_pad) in-kernel temporaries.
    bytes_per_row = 2 * c_pad * itemsize + 2 * _LANES * 4 + 5 * c_pad * 4
    max_rows = min(_MAX_TILE_ROWS, max(sub, budget // bytes_per_row))
    if tile_rows is not None:
        max_rows = max(1, int(tile_rows))
    tile_n = n if n <= max_rows else max(sub, (max_rows // sub) * sub)

    total_tiles = pl.cdiv(n, tile_n)
    if num_splits is None:
        num_splits = 2 if total_tiles > 1 else 1       # one split per v7x TensorCore
    t_split = pl.cdiv(total_tiles, num_splits)
    last_block = total_tiles - 1
    covered = num_splits * t_split * tile_n
    n_valid = n if covered != n else None               # skip the row mask when exact

    def in_map(p, i):
        return (jnp.minimum(p * t_split + i, last_block), 0)

    kernel = functools.partial(_cross_entropy_kernel,
                               rows_per_split=t_split * tile_n, n_valid=n_valid)
    cost = pl.CostEstimate(
        flops=6 * n * c, transcendentals=n * c + n,
        bytes_accessed=n * c * itemsize + n * 4 + num_splits * _ACC_SUB * _LANES * 4)

    total = _launch(kernel,
                    (pred, target.astype(jnp.int32).reshape(n, 1)),
                    [(tile_n, c), (tile_n, 1)],
                    in_map, num_splits, t_split, vmem_limit, cost)
    return total / n if reduction == "mean" else total


def binary_cross_entropy_loss(pred, target, wloss=False, reduction="mean",
                              tile_rows=None, num_splits=None):
    """mean/sum BCE(sigmoid(pred), target) with optional 0.7/0.3 class weighting."""
    assert reduction in ("mean", "sum")
    n = int(pred.size)
    p_item = jnp.dtype(pred.dtype).itemsize
    t_item = jnp.dtype(target.dtype).itemsize
    sub = max(_sublane(pred.dtype), _sublane(target.dtype))

    # lane-dense layout: flatten -> (R, 128); pad only when N is not 128-aligned.
    x = pred.reshape(-1)
    t = target.reshape(-1)                 # native dtype; upcast happens in-kernel
    n_pad = _round_up(n, _LANES)
    if n_pad != n:
        x = jnp.pad(x, (0, n_pad - n))
        t = jnp.pad(t, (0, n_pad - n))
    r = n_pad // _LANES
    x2 = x.reshape(r, _LANES)
    t2 = t.reshape(r, _LANES)

    budget, vmem_limit = _vmem_plan()
    bytes_per_row = 2 * _LANES * p_item + 2 * _LANES * t_item + 4 * _LANES * 4
    max_rows = min(_MAX_TILE_ROWS, max(sub, budget // bytes_per_row))
    if tile_rows is not None:
        max_rows = max(1, int(tile_rows))
    tile_r = r if r <= max_rows else max(sub, (max_rows // sub) * sub)

    total_tiles = pl.cdiv(r, tile_r)
    if num_splits is None:
        num_splits = 2 if total_tiles > 1 else 1
    t_split = pl.cdiv(total_tiles, num_splits)
    last_block = total_tiles - 1
    covered = num_splits * t_split * tile_r * _LANES
    n_valid = n if covered != n else None

    def in_map(p, i):
        return (jnp.minimum(p * t_split + i, last_block), 0)

    kernel = functools.partial(_bce_kernel, rows_per_split=t_split * tile_r,
                               n_valid=n_valid, wloss=bool(wloss))
    cost = pl.CostEstimate(
        flops=12 * n_pad, transcendentals=2 * n_pad,
        bytes_accessed=n_pad * (p_item + t_item) + num_splits * _ACC_SUB * _LANES * 4)

    total = _launch(kernel, (x2, t2),
                    [(tile_r, _LANES), (tile_r, _LANES)],
                    in_map, num_splits, t_split, vmem_limit, cost)
    return total / n if reduction == "mean" else total


def loss_forward(pred, target, classes, wloss=False, device=None, reduction="mean"):
    """Equivalent of Loss(reduction).forward(pred, target, classes, wloss, device)."""
    if classes > 2:
        return cross_entropy_loss(pred, target, reduction=reduction)
    elif classes == 2:
        return binary_cross_entropy_loss(pred, target, wloss=wloss, reduction=reduction)
    # Reference module only defines behavior for classes >= 2.
    raise ValueError("classes must be >= 2")


# ------------------------------- demo ---------------------------------------


def _ref_ce(pred, target):
    logp = jax.nn.log_softmax(pred.astype(jnp.float32), axis=-1)
    return -jnp.mean(logp[jnp.arange(pred.shape[0]), target])


def _ref_bce(pred, target, wloss):
    p = jax.nn.sigmoid(pred.astype(jnp.float32)).reshape(-1)
    t = target.astype(jnp.float32).reshape(-1)
    l = -(t * jnp.maximum(jnp.log(p), -100.0)
          + (1.0 - t) * jnp.maximum(jnp.log1p(-p), -100.0))
    if wloss:
        l = jnp.where(t == 1.0, 0.7, 0.3) * l
    return jnp.mean(l)


if __name__ == "__main__":
    key = jax.random.PRNGKey(0)
    ks = jax.random.split(key, 8)

    # Multiclass branch: batch=8, classes=16 (single tile, single split)
    N, C = 8, 16
    pred_mc = jax.random.normal(ks[0], (N, C), dtype=jnp.float32)
    target_mc = jax.random.randint(ks[1], (N,), 0, C)
    loss_mc = loss_forward(pred_mc, target_mc, classes=C, wloss=False)

    # Multi-tile CE exercising the dual-split parallel axis + clamp + edge-row mask
    N2 = 40
    pred_mc2 = jax.random.normal(ks[2], (N2, C), dtype=jnp.float32)
    target_mc2 = jax.random.randint(ks[3], (N2,), 0, C)
    loss_mc2 = cross_entropy_loss(pred_mc2, target_mc2, tile_rows=16)

    # bf16 input path (upcast happens inside the kernel)
    loss_mc_bf16 = cross_entropy_loss(pred_mc2.astype(jnp.bfloat16), target_mc2)

    # Binary branch: batch=8, pred is (N, 1) logit, target is (N,) in {0,1}
    pred_bin = jax.random.normal(ks[4], (N, 1), dtype=jnp.float32)
    target_bin = jax.random.randint(ks[5], (N,), 0, 2)
    loss_bce = loss_forward(pred_bin, target_bin, classes=2, wloss=False)
    loss_bce_w = loss_forward(pred_bin, target_bin, classes=2, wloss=True)

    # Multi-tile weighted BCE exercising the dual-split parallel axis
    N3 = 2048
    pred_bin2 = jax.random.normal(ks[6], (N3, 1), dtype=jnp.float32)
    target_bin2 = jax.random.randint(ks[7], (N3,), 0, 2)
    loss_bce2 = binary_cross_entropy_loss(pred_bin2, target_bin2, wloss=True, tile_rows=8)

    results = jax.block_until_ready(
        (loss_mc, loss_mc2, loss_mc_bf16, loss_bce, loss_bce_w, loss_bce2))

    # sanity checks against pure-jnp references
    np.testing.assert_allclose(results[0], _ref_ce(pred_mc, target_mc),
                               rtol=1e-5, atol=1e-5)
    np.testing.assert_allclose(results[1], _ref_ce(pred_mc2, target_mc2),
                               rtol=1e-5, atol=1e-5)
    np.testing.assert_allclose(
        results[2],
        _ref_ce(pred_mc2.astype(jnp.bfloat16).astype(jnp.float32), target_mc2),
        rtol=1e-5, atol=1e-5)
    np.testing.assert_allclose(results[3], _ref_bce(pred_bin, target_bin, False),
                               rtol=1e-5, atol=1e-5)
    np.testing.assert_allclose(results[4], _ref_bce(pred_bin, target_bin, True),
                               rtol=1e-5, atol=1e-5)
    np.testing.assert_allclose(results[5], _ref_bce(pred_bin2, target_bin2, True),
                               rtol=1e-5, atol=1e-5)

    print("KERNEL_OK")
</pallas_src>

<mosaic_0001>
module attributes {stable_mosaic.version = 11 : i64} {
  func.func @_cross_entropy_kernel(%arg0: i32, %arg1: i32, %arg2: memref<8x16xf32, #tpu.memory_space<vmem>>, %arg3: memref<8x1xi32, #tpu.memory_space<vmem>>, %arg4: memref<1x8x128xf32, #tpu.memory_space<vmem>>, %arg5: memref<1xf32, #tpu.memory_space<smem>>) attributes {dimension_semantics = [#tpu.dimension_semantics<parallel>, #tpu.dimension_semantics<arbitrary>], iteration_bounds = array<i64: 1, 1>, scalar_prefetch = 0 : i64, scratch_operands = 1 : i64, tpu.core_type = #tpu.core_type<tc>, window_params = [{transform_indices = @transform_0, window_bounds = array<i64: 8, 16>}, {transform_indices = @transform_1, window_bounds = array<i64: 8, 1>}, {transform_indices = @transform_2, window_bounds = array<i64: 1, 8, 128>}]} {
    %c0_i32 = arith.constant 0 : i32
    %0 = arith.cmpi eq, %arg1, %c0_i32 : i32
    %1 = arith.extui %0 : i1 to i32
    %c0_i32_0 = arith.constant 0 : i32
    %2 = arith.cmpi ne, %1, %c0_i32_0 : i32
    scf.if %2 {
      %cst_12 = arith.constant 0.000000e+00 : f32
      %c0_13 = arith.constant 0 : index
      %31 = memref.load %arg5[%c0_13] : memref<1xf32, #tpu.memory_space<smem>>
      memref.store %cst_12, %arg5[%c0_13] : memref<1xf32, #tpu.memory_space<smem>>
    } else {
    }
    %c0 = arith.constant 0 : index
    %c0_1 = arith.constant 0 : index
    %3 = vector.load %arg2[%c0, %c0_1] : memref<8x16xf32, #tpu.memory_space<vmem>>, vector<8x16xf32>
    %c0_2 = arith.constant 0 : index
    %c0_3 = arith.constant 0 : index
    %4 = vector.load %arg3[%c0_2, %c0_3] : memref<8x1xi32, #tpu.memory_space<vmem>>, vector<8x1xi32>
    %cst = arith.constant dense<0xFF800000> : vector<8xf32>
    %5 = vector.multi_reduction <maximumf>, %3, %cst [1] : vector<8x16xf32> to vector<8xf32>
    %6 = vector.shape_cast %5 : vector<8xf32> to vector<8x1xf32>
    %7 = vector.broadcast %6 : vector<8x1xf32> to vector<8x16xf32>
    %8 = arith.subf %3, %7 : vector<8x16xf32>
    %9 = tpu.iota {dimensions = array<i32: 1>} : vector<8x16xi32>
    %10 = vector.broadcast %4 : vector<8x1xi32> to vector<8x16xi32>
    %11 = arith.cmpi eq, %9, %10 : vector<8x16xi32>
    %cst_4 = arith.constant 0.000000e+00 : f32
    %12 = vector.broadcast %cst_4 : f32 to vector<8x16xf32>
    %13 = arith.select %11, %8, %12 : vector<8x16xi1>, vector<8x16xf32>
    %cst_5 = arith.constant dense<0.000000e+00> : vector<8xf32>
    %14 = vector.multi_reduction <add>, %13, %cst_5 [1] : vector<8x16xf32> to vector<8xf32>
    %15 = vector.shape_cast %14 : vector<8xf32> to vector<8x1xf32>
    %16 = math.exp %8 : vector<8x16xf32>
    %cst_6 = arith.constant dense<0.000000e+00> : vector<8xf32>
    %17 = vector.multi_reduction <add>, %16, %cst_6 [1] : vector<8x16xf32> to vector<8xf32>
    %18 = vector.shape_cast %17 : vector<8xf32> to vector<8x1xf32>
    %19 = math.log %18 : vector<8x1xf32>
    %20 = arith.subf %19, %15 : vector<8x1xf32>
    %c0_7 = arith.constant 0 : index
    %21 = memref.load %arg5[%c0_7] : memref<1xf32, #tpu.memory_space<smem>>
    %22 = vector.shape_cast %20 : vector<8x1xf32> to vector<1x8x1xf32>
    %cst_8 = arith.constant dense<0.000000e+00> : vector<1xf32>
    %23 = vector.multi_reduction <add>, %22, %cst_8 [1, 2] : vector<1x8x1xf32> to vector<1xf32>
    %24 = vector.shape_cast %23 : vector<1xf32> to vector<1x1x1xf32>
    %25 = vector.extract %24[0, 0, 0] : f32 from vector<1x1x1xf32>
    %26 = arith.addf %21, %25 : f32
    %c0_9 = arith.constant 0 : index
    %27 = memref.load %arg5[%c0_9] : memref<1xf32, #tpu.memory_space<smem>>
    memref.store %26, %arg5[%c0_9] : memref<1xf32, #tpu.memory_space<smem>>
    %c0_i32_10 = arith.constant 0 : i32
    %28 = arith.cmpi eq, %arg1, %c0_i32_10 : i32
    %29 = arith.extui %28 : i1 to i32
    %c0_i32_11 = arith.constant 0 : i32
    %30 = arith.cmpi ne, %29, %c0_i32_11 : i32
    scf.if %30 {
      %c0_12 = arith.constant 0 : index
      %31 = memref.load %arg5[%c0_12] : memref<1xf32, #tpu.memory_space<smem>>
      %32 = vector.broadcast %31 : f32 to vector<1x8x128xf32>
      %c0_13 = arith.constant 0 : index
      %c0_14 = arith.constant 0 : index
      %c0_15 = arith.constant 0 : index
      %33 = vector.load %arg4[%c0_13, %c0_14, %c0_15] : memref<1x8x128xf32, #tpu.memory_space<vmem>>, vector<1x8x128xf32>
      tpu.vector_store %arg4[%c0_13, %c0_14, %c0_15], %32 {strides = array<i32>} : memref<1x8x128xf32, #tpu.memory_space<vmem>>, vector<1x8x128xf32>,
    } else {
    }
    return
  }
  func.func @transform_0(%arg0: i32, %arg1: i32) -> (i32, i32) {
    %c1_i32 = arith.constant 1 : i32
    %0 = arith.muli %arg0, %c1_i32 : i32
    %1 = arith.addi %0, %arg1 : i32
    %c0_i32 = arith.constant 0 : i32
    %2 = arith.minsi %1, %c0_i32 : i32
    %c0_i32_0 = arith.constant 0 : i32
    %c0_i32_1 = arith.constant 0 : i32
    return %2, %c0_i32_0 : i32, i32
  }
  func.func @transform_1(%arg0: i32, %arg1: i32) -> (i32, i32) {
    %c1_i32 = arith.constant 1 : i32
    %0 = arith.muli %arg0, %c1_i32 : i32
    %1 = arith.addi %0, %arg1 : i32
    %c0_i32 = arith.constant 0 : i32
    %2 = arith.minsi %1, %c0_i32 : i32
    %c0_i32_0 = arith.constant 0 : i32
    %c0_i32_1 = arith.constant 0 : i32
    return %2, %c0_i32_0 : i32, i32
  }
  func.func @transform_2(%arg0: i32, %arg1: i32) -> (i32, i32, i32) {
    %c0_i32 = arith.constant 0 : i32
    %c0_i32_0 = arith.constant 0 : i32
    %c0_i32_1 = arith.constant 0 : i32
    return %arg0, %c0_i32, %c0_i32_0 : i32, i32, i32
  }
}

</mosaic_0001>

<llo_original>
// kernel: tpu_custom_call.1
$region0: #{tpu_custom_call.1}
  #allocation0 [shape = 'u32[]', space=smem, size = 0x4, offset = 0x4, fixed_abs, tag = 'smem constant byte address 0x4 - core index']
  #allocation1 [shape = 'u32[144,128]{1,0:T(1,128)}', space=vmem, size = 0x12000, scoped, tag = 'internal scratch']
  #allocation2 [shape = 'f32[1]{0:T(128)}', space=smem, size = 0x200, scoped, tag = 'scratch operand']
  %s0 = inlined_call_operand.vmem [shape: f32[8,16], index: 0, kind: input, shape index: {}]
  %s1 = inlined_call_operand.vmem [shape: s32[8,1], index: 1, kind: input, shape index: {}]
  %s2 = inlined_call_operand.hbm [shape: f32[1,8,128], index: 2, kind: output, shape index: {}]
  %s3 = sld [smem:[#allocation0]]
  $region26: #{tpu_custom_call.1} parent=0
    _
  %s5 = ssub.s32 1, %s3
  %s6 = scalar_select 0, %s5, %s3
  $region1: #{tpu_custom_call.1} parent=0
    #allocation3 [shape = 'u8[4096]{0}', space=vmem, size = 0x1000, scoped, tag = 'output window, operand 0, single buffered']
    #allocation4 [shape = 's32[1]{0}', space=sflag, size = 0x4, scoped, tag = 'scoped memory for tpu_custom_call.1']
    %7 = vsyncpa [#allocation4], 0
    // Predicated region
    $region2: #{tpu_custom_call.1} parent=1 // pred_check
      _
    $region3: #{tpu_custom_call.1} parent=1 // pred_check_branch
      %9 = sbr.rel (0) target = $region5
    $region4: #{tpu_custom_call.1} parent=1 // pred_region
      %s10 = sadd.s32 0, 0
      %p11 = scmp.lt.s32.totalorder %s10, 0
      %s12 = scalar_select %p11, %s10, 0
      %p13 = scmp.lt.s32.totalorder %s12, 0
      %s14 = scalar_select %p13, %s12, 0
      %s15 = smul.addr %s14, 8
      %s16 = scalar_lea.vmem %s0, %s15
      %s17 = sadd.s32 0, 0
      %p18 = scmp.lt.s32.totalorder %s17, 0
      %s19 = scalar_select %p18, %s17, 0
    $region5: #{tpu_custom_call.1} parent=1 // pred_fallthru
      _
    // Predicated region
    $region6: #{tpu_custom_call.1} parent=1 // pred_check
      _
    $region7: #{tpu_custom_call.1} parent=1 // pred_check_branch
      %21 = sbr.rel (0) target = $region9
    $region8: #{tpu_custom_call.1} parent=1 // pred_region
      %s22 = sadd.s32 0, 0
      %p23 = scmp.lt.s32.totalorder %s22, 0
      %s24 = scalar_select %p23, %s22, 0
      %p25 = scmp.lt.s32.totalorder %s24, 0
      %s26 = scalar_select %p25, %s24, 0
      %s27 = smul.addr %s26, 8
      %s28 = scalar_lea.vmem %s1, %s27
      %s29 = sadd.s32 0, 0
      %p30 = scmp.lt.s32.totalorder %s29, 0
      %s31 = scalar_select %p30, %s29, 0
    $region9: #{tpu_custom_call.1} parent=1 // pred_fallthru
      _
    %s32 = sadd.s32 0, 0
    %p33 = scmp.lt.s32.totalorder %s32, 0
    %s34 = scalar_select %p33, %s32, 0
    %p35 = scmp.lt.s32.totalorder %s34, 0
    %s36 = scalar_select %p35, %s34, 0
    %s37 = smul.addr %s36, 8
    %s38 = scalar_lea.vmem %s0, %s37
    %s39 = sadd.s32 0, 0
    %p40 = scmp.lt.s32.totalorder %s39, 0
    %s41 = scalar_select %p40, %s39, 0
    %p42 = scmp.lt.s32.totalorder %s41, 0
    %s43 = scalar_select %p42, %s41, 0
    %s44 = smul.addr %s43, 8
    %s45 = scalar_lea.vmem %s1, %s44
    %s46 = sadd.s32 0, 0
    %p47 = scmp.lt.s32.totalorder %s46, 0
    %s48 = scalar_select %p47, %s46, 0
    %p49 = scmp.lt.s32.totalorder %s48, 0
    %s50 = scalar_select %p49, %s48, 0
    %s51 = smul.addr %s50, 8
    %s52 = scalar_lea.vmem %s0, %s51
    %s53 = sadd.s32 0, 0
    %p54 = scmp.lt.s32.totalorder %s53, 0
    %s55 = scalar_select %p54, %s53, 0
    %s56 = sadd.s32 0, 0
    %p57 = scmp.lt.s32.totalorder %s56, 0
    %s58 = scalar_select %p57, %s56, 0
    %p59 = scmp.lt.s32.totalorder %s58, 0
    %s60 = scalar_select %p59, %s58, 0
    %s61 = smul.addr %s60, 8
    %s62 = scalar_lea.vmem %s1, %s61
    %s63 = sadd.s32 0, 0
    %p64 = scmp.lt.s32.totalorder %s63, 0
    %s65 = scalar_select %p64, %s63, 0
    %p66 = scmp.eq.s32.totalorder 0, 0
    // Predicated region
    $region10: #{tpu_custom_call.1} parent=1 // pred_check
      %p67 = pneg %p66
    $region11: #{tpu_custom_call.1} parent=1 // pred_check_branch
      %69 = sbr.rel (%p67) target = $region13
    $region12: #{tpu_custom_call.1} parent=1 // pred_region
      %s70 = scalar_lea.smem [#allocation2], 0
      %71 = sst [smem:[%s70]] 0.0
    $region13: #{tpu_custom_call.1} parent=1 // pred_fallthru
      _
    %v72 = vld [vmem:[%s52] sm:$0xff]
    %v73 = vld [vmem:[%s62] sm:$0xff]
    %vm74 = vcmask 130048
    %v75 = vsel %vm74, %v72, -inf
    %76 = vmax.xlane.f32.xlu0 %v75
    %v77 = vpop.xlane.xlu0 %76
    %v78 = vsub.f32 %v72, %v77
    %v79 = vlaneseq
    %v80 = vand.u32 %v79, 127
    %81 = vset.pattern.permute.xlu0 0
    %82 = vperm.xlu0 %81, %v73
    %v83 = vpop.permute.xlu0 %82
    %vm84 = vcmp.eq.s32.totalorder %v80, %v83
    %v85 = vsel %vm84, %v78, 0.0
    %v86 = vsel %vm74, %v85, 0.0
    %87 = vadd.xlane.f32.xlu0 %v86
    %v88 = vpop.xlane.xlu0 %87
    %v89 = vmul.f32 %v78, 1.442695
    %v90 = vpow.pop %v89
    %v91 = vsel %vm74, %v90, 0.0
    %92 = vadd.xlane.f32.xlu0 %v91
    %v93 = vpop.xlane.xlu0 %92
    %v94 = vlog2.pop %v93
    %v95 = vmul.f32 %v94, 0.6931472
    %v96 = vsub.f32 %v95, %v88
    %s97 = sld [smem:[#allocation2]]
    %vm98 = vcmask 7168
    %v99 = vsel %vm98, %v96, 0.0
    %100 = vadd.xlane.f32.xlu0 %v99
    %v101 = vpop.xlane.xlu0 %100
    %v102 = vrot.slane %v101, 4
    %v103 = vadd.f32 %v101, %v102
    %v104 = vrot.slane %v103, 2
    %v105 = vadd.f32 %v103, %v104
    %v106 = vrot.slane %v105, 1
    %v107 = vadd.f32 %v105, %v106
    %s108 = vtos %v107
    %s109 = sadd.f32 %s97, %s108
    %s110 = scalar_lea.smem [#allocation2], 0
    %111 = sst [smem:[%s110]] %s109
    // Predicated region
    $region14: #{tpu_custom_call.1} parent=1 // pred_check
      %p112 = pneg %p66
    $region15: #{tpu_custom_call.1} parent=1 // pred_check_branch
      %114 = sbr.rel (%p112) target = $region17
    $region16: #{tpu_custom_call.1} parent=1 // pred_region
      %s115 = sld [smem:[#allocation2]]
      %v116 = vstv %s115
      %117 = vst [vmem:[#allocation3] sm:$0xff] %v116
    $region17: #{tpu_custom_call.1} parent=1 // pred_fallthru
      _
    // Predicated region
    $region18: #{tpu_custom_call.1} parent=1 // pred_check
      _
    $region19: #{tpu_custom_call.1} parent=1 // pred_check_branch
      %119 = sbr.rel (0) target = $region21
    $region20: #{tpu_custom_call.1} parent=1 // pred_region
      %s121 = ssub.s32 128, 128
      %122 = vsyncadd [#allocation4], %s121
      %s124 = sshll.u32 [#allocation3], 4
      %s125 = int_to_ptr.vmem [resolvable:$true] %s124
      %127 = dma.vmem_to_hbm [thread:$0]  %s125, 128, %s2, [#allocation4]
    $region21: #{tpu_custom_call.1} parent=1 // pred_fallthru
      _
    // Predicated region
    $region22: #{tpu_custom_call.1} parent=1 // pred_check
      _
    $region23: #{tpu_custom_call.1} parent=1 // pred_check_branch
      %129 = sbr.rel (0) target = $region25
    $region24: #{tpu_custom_call.1} parent=1 // pred_region
      %130 = dma.done [#allocation4], 128
    $region25: #{tpu_custom_call.1} parent=1 // pred_fallthru
      _
    %131 = vsyncpa [#allocation4], 1

</llo_original>
